<compile_context>
chip_gen: v5e
topology: v5e:2x2
jax: 0.10.0
libtpu: 0.0.40
codegen_flags: <defaults>
</compile_context>

<pallas_src>
import jax
import jax.numpy as jnp
from jax.experimental import pallas as pl
from jax.experimental.pallas import tpu as pltpu

LANES = 128            # vreg lane width
MAX_BLOCK_ROWS = 4096  # 4096*128*4B = 2 MiB per f32 input buffer per grid step


def _round_up(x, m):
    return ((x + m - 1) // m) * m


def _num_tensorcores():
    """TensorCores one pallas_call can split a 'parallel' grid axis across."""
    try:
        kind = jax.devices()[0].device_kind.lower()
    except Exception:
        return 1
    for tag in ("v7", "v5p", "v4"):   # dual-TC (megacore) chips
        if tag in kind:
            return 2
    return 1                          # v5e / v6e: single TensorCore


def _sublane_multiple(dtype):
    # f32 -> 8 sublanes, bf16/f16 -> 16, int8/fp8 -> 32 (sublane packing).
    return max(8, 32 // jnp.dtype(dtype).itemsize)


def weighted_bce_loss(logits, labels, weights, params=None):
    """Pallas implementation of WeightedBCELoss.forward."""
    del params  # unused in the reference forward
    n_elem = int(logits.size)
    rows = pl.cdiv(n_elem, LANES)

    sub = max(_sublane_multiple(a.dtype) for a in (logits, labels, weights))

    # Block height: as large as possible (up to MAX_BLOCK_ROWS), multiple of
    # the sublane-packing requirement of the widest-packed input dtype.
    if rows <= MAX_BLOCK_ROWS:
        tm = _round_up(max(rows, sub), sub)
    else:
        tm = _round_up(MAX_BLOCK_ROWS, sub)
    n_blocks = pl.cdiv(rows, tm)

    # Megacore split only where it exists; never pad the block count for it.
    n_par = max(1, min(_num_tensorcores(), n_blocks))
    n_steps = pl.cdiv(n_blocks, n_par)

    covered = n_par * n_steps * tm * LANES
    mask_needed = covered != n_elem          # ragged tail and/or phantom steps

    lane_pad = rows * LANES - n_elem         # < 128; nonzero iff n_elem % 128

    def _prep(a):
        flat = a.reshape(-1)                 # native dtype, no copy / no cast
        if lane_pad:
            # Rare fallback: pad to a whole number of 128-lane rows.  The pad
            # value is irrelevant: those elements are masked out in-kernel.
            flat = jnp.pad(flat, (0, lane_pad))
        return flat.reshape(rows, LANES)

    lf, yf, wf = _prep(logits), _prep(labels), _prep(weights)

    last_blk = n_blocks - 1

    def _in_index(p, j):
        # Clamp phantom steps (p*n_steps + j >= n_blocks) onto the last real
        # block; their contribution is zeroed by the in-kernel tail mask, so
        # no zero-filled data is ever read from HBM.
        return (jnp.minimum(p * n_steps + j, last_blk), 0)

    in_spec = pl.BlockSpec((tm, LANES), _in_index)
    out_spec = pl.BlockSpec((1, 8, LANES), lambda p, j: (p, 0, 0))

    def _kernel(logits_ref, labels_ref, weights_ref, wout_ref, uout_ref,
                wacc, uacc):
        j = pl.program_id(1)  # inner "arbitrary" (reduction) axis

        @pl.when(j == 0)
        def _():
            wacc[...] = jnp.zeros_like(wacc)
            uacc[...] = jnp.zeros_like(uacc)

        x = logits_ref[...].astype(jnp.float32)   # probabilities in [0, 1]
        y = labels_ref[...].astype(jnp.float32)
        w = weights_ref[...].astype(jnp.float32)

        # PyTorch BCELoss clamps log outputs at -100 for numerical stability.
        log_x = jnp.maximum(jnp.log(x), -100.0)
        log_1mx = jnp.maximum(jnp.log(1.0 - x), -100.0)
        nll = -(y * log_x + (1.0 - y) * log_1mx)
        wnll = nll * w

        if mask_needed:
            # Tail/phantom mask on the GLOBAL element index.  Applied to BOTH
            # accumulands with a select (not a multiply), so NaNs produced by
            # log() on out-of-bounds garbage cannot poison the accumulators.
            # (int32 index math: fine up to ~2^31 elements.)
            p = pl.program_id(0)
            blk = p * n_steps + j                 # logical (unclamped) block
            row0 = blk * tm
            row_ids = jax.lax.broadcasted_iota(jnp.int32, (tm, LANES), 0) + row0
            lane_ids = jax.lax.broadcasted_iota(jnp.int32, (tm, LANES), 1)
            valid = row_ids * LANES + lane_ids < n_elem
            nll = jnp.where(valid, nll, 0.0)
            wnll = jnp.where(valid, wnll, 0.0)

        # Vreg-wise accumulation: (tm,128) -> (tm//8, 8, 128), sum over the
        # leading axis = pure VPU adds, no cross-lane/sublane (XLU) work.
        uacc[...] += nll.reshape(tm // 8, 8, LANES).sum(axis=0)
        wacc[...] += wnll.reshape(tm // 8, 8, LANES).sum(axis=0)

        # Single lane/sublane-dense store per core at the very end.
        @pl.when(j == n_steps - 1)
        def _():
            wout_ref[...] = wacc[...].reshape(1, 8, LANES)
            uout_ref[...] = uacc[...].reshape(1, 8, LANES)

    in_bytes = sum(int(a.size) * jnp.dtype(a.dtype).itemsize
                   for a in (logits, labels, weights))

    wpart, upart = pl.pallas_call(
        _kernel,
        out_shape=(jax.ShapeDtypeStruct((n_par, 8, LANES), jnp.float32),
                   jax.ShapeDtypeStruct((n_par, 8, LANES), jnp.float32)),
        grid_spec=pltpu.PrefetchScalarGridSpec(
            num_scalar_prefetch=0,
            grid=(n_par, n_steps),
            in_specs=[in_spec, in_spec, in_spec],
            out_specs=(out_spec, out_spec),
            scratch_shapes=[pltpu.VMEM((8, LANES), jnp.float32),
                            pltpu.VMEM((8, LANES), jnp.float32)],
        ),
        compiler_params=pltpu.CompilerParams(
            dimension_semantics=("parallel", "arbitrary"),
            vmem_limit_bytes=48 * 1024 * 1024),
        cost_estimate=pl.CostEstimate(
            flops=10 * n_elem,
            transcendentals=2 * n_elem,
            bytes_accessed=in_bytes + 2 * n_par * 8 * LANES * 4),
    )(lf, yf, wf)

    inv_n = jnp.float32(1.0 / n_elem)
    nll = jnp.sum(wpart) * inv_n
    unweighted = jnp.sum(upart) * inv_n
    zero = jnp.array(0, dtype=jnp.int32)
    return nll, zero, zero, zero, unweighted


def _reference(logits, labels, weights):
    x = logits.astype(jnp.float32)
    y = labels.astype(jnp.float32)
    nll = -(y * jnp.maximum(jnp.log(x), -100.0)
            + (1.0 - y) * jnp.maximum(jnp.log(1.0 - x), -100.0))
    return jnp.mean(nll * weights.astype(jnp.float32)), jnp.mean(nll)


def _check(shape, key):
    k1, k2, k3 = jax.random.split(key, 3)
    logits = jax.nn.sigmoid(jax.random.normal(k1, shape, dtype=jnp.float32))
    labels = jax.random.bernoulli(k2, 0.5, shape).astype(jnp.float32)
    weights = jax.random.uniform(k3, shape, dtype=jnp.float32,
                                 minval=0.1, maxval=2.0)

    out = weighted_bce_loss(logits, labels, weights, None)
    out = jax.block_until_ready(out)

    ref_nll, ref_unw = _reference(logits, labels, weights)
    for got, ref in ((out[0], ref_nll), (out[4], ref_unw)):
        err = abs(float(got) - float(ref))
        assert err <= 1e-4 + 2e-4 * abs(float(ref)), (shape, float(got), float(ref))
    assert int(out[1]) == 0 and int(out[2]) == 0 and int(out[3]) == 0


if __name__ == "__main__":
    key = jax.random.PRNGKey(0)
    k_a, k_b, k_c = jax.random.split(key, 3)

    # Primary NCHW demo shape (PyTorch caller convention): single block,
    # exactly lane-aligned -> no masking, no padding.
    _check((2, 4, 16, 16), k_a)

    # Multi-block reduction axis with a ragged last block: exercises the
    # in-kernel tail mask with zero wrapper-side padding of the full arrays.
    _check((2, 4, 400, 200), k_b)

    # Element count not divisible by 128: exercises the small lane pad plus
    # the tail mask inside a single oversized block.
    _check((3, 5, 7, 11), k_c)

    print("KERNEL_OK")
</pallas_src>

<mosaic_0001>
module attributes {stable_mosaic.version = 11 : i64} {
  func.func @_kernel(%arg0: i32, %arg1: i32, %arg2: memref<16x128xf32, #tpu.memory_space<vmem>>, %arg3: memref<16x128xf32, #tpu.memory_space<vmem>>, %arg4: memref<16x128xf32, #tpu.memory_space<vmem>>, %arg5: memref<1x8x128xf32, #tpu.memory_space<vmem>>, %arg6: memref<1x8x128xf32, #tpu.memory_space<vmem>>, %arg7: memref<8x128xf32, #tpu.memory_space<vmem>>, %arg8: memref<8x128xf32, #tpu.memory_space<vmem>>) attributes {dimension_semantics = [#tpu.dimension_semantics<parallel>, #tpu.dimension_semantics<arbitrary>], iteration_bounds = array<i64: 1, 1>, scalar_prefetch = 0 : i64, scratch_operands = 2 : i64, tpu.core_type = #tpu.core_type<tc>, window_params = [{transform_indices = @transform_0, window_bounds = array<i64: 16, 128>}, {transform_indices = @transform_1, window_bounds = array<i64: 16, 128>}, {transform_indices = @transform_2, window_bounds = array<i64: 16, 128>}, {transform_indices = @transform_3, window_bounds = array<i64: 1, 8, 128>}, {transform_indices = @transform_4, window_bounds = array<i64: 1, 8, 128>}]} {
    %c0_i32 = arith.constant 0 : i32
    %0 = arith.cmpi eq, %arg1, %c0_i32 : i32
    %1 = arith.extui %0 : i1 to i32
    %c0_i32_0 = arith.constant 0 : i32
    %2 = arith.cmpi ne, %1, %c0_i32_0 : i32
    scf.if %2 {
      %cst_22 = arith.constant 0.000000e+00 : f32
      %35 = vector.broadcast %cst_22 : f32 to vector<8x128xf32>
      %c0_23 = arith.constant 0 : index
      %c0_24 = arith.constant 0 : index
      %36 = vector.load %arg7[%c0_23, %c0_24] : memref<8x128xf32, #tpu.memory_space<vmem>>, vector<8x128xf32>
      tpu.vector_store %arg7[%c0_23, %c0_24], %35 {strides = array<i32>} : memref<8x128xf32, #tpu.memory_space<vmem>>, vector<8x128xf32>,
      %cst_25 = arith.constant 0.000000e+00 : f32
      %37 = vector.broadcast %cst_25 : f32 to vector<8x128xf32>
      %c0_26 = arith.constant 0 : index
      %c0_27 = arith.constant 0 : index
      %38 = vector.load %arg8[%c0_26, %c0_27] : memref<8x128xf32, #tpu.memory_space<vmem>>, vector<8x128xf32>
      tpu.vector_store %arg8[%c0_26, %c0_27], %37 {strides = array<i32>} : memref<8x128xf32, #tpu.memory_space<vmem>>, vector<8x128xf32>,
    } else {
    }
    %c0 = arith.constant 0 : index
    %c0_1 = arith.constant 0 : index
    %3 = vector.load %arg2[%c0, %c0_1] : memref<16x128xf32, #tpu.memory_space<vmem>>, vector<16x128xf32>
    %c0_2 = arith.constant 0 : index
    %c0_3 = arith.constant 0 : index
    %4 = vector.load %arg3[%c0_2, %c0_3] : memref<16x128xf32, #tpu.memory_space<vmem>>, vector<16x128xf32>
    %c0_4 = arith.constant 0 : index
    %c0_5 = arith.constant 0 : index
    %5 = vector.load %arg4[%c0_4, %c0_5] : memref<16x128xf32, #tpu.memory_space<vmem>>, vector<16x128xf32>
    %6 = math.log %3 : vector<16x128xf32>
    %cst = arith.constant -1.000000e+02 : f32
    %7 = vector.broadcast %cst : f32 to vector<16x128xf32>
    %8 = arith.maximumf %6, %7 : vector<16x128xf32>
    %cst_6 = arith.constant 1.000000e+00 : f32
    %9 = vector.broadcast %cst_6 : f32 to vector<16x128xf32>
    %10 = arith.subf %9, %3 : vector<16x128xf32>
    %11 = math.log %10 : vector<16x128xf32>
    %cst_7 = arith.constant -1.000000e+02 : f32
    %12 = vector.broadcast %cst_7 : f32 to vector<16x128xf32>
    %13 = arith.maximumf %11, %12 : vector<16x128xf32>
    %14 = arith.mulf %4, %8 : vector<16x128xf32>
    %cst_8 = arith.constant 1.000000e+00 : f32
    %15 = vector.broadcast %cst_8 : f32 to vector<16x128xf32>
    %16 = arith.subf %15, %4 : vector<16x128xf32>
    %17 = arith.mulf %16, %13 : vector<16x128xf32>
    %18 = arith.addf %14, %17 : vector<16x128xf32>
    %cst_9 = arith.constant 0.000000e+00 : f32
    %19 = vector.broadcast %cst_9 : f32 to vector<16x128xf32>
    %20 = arith.subf %19, %18 : vector<16x128xf32>
    %21 = arith.mulf %20, %5 : vector<16x128xf32>
    %c0_10 = arith.constant 0 : index
    %c0_11 = arith.constant 0 : index
    %22 = vector.load %arg8[%c0_10, %c0_11] : memref<8x128xf32, #tpu.memory_space<vmem>>, vector<8x128xf32>
    %23 = vector.shape_cast %20 : vector<16x128xf32> to vector<2x8x128xf32>
    %cst_12 = arith.constant dense<0.000000e+00> : vector<8x128xf32>
    %24 = vector.multi_reduction <add>, %23, %cst_12 [0] : vector<2x8x128xf32> to vector<8x128xf32>
    %25 = arith.addf %22, %24 : vector<8x128xf32>
    %c0_13 = arith.constant 0 : index
    %c0_14 = arith.constant 0 : index
    %26 = vector.load %arg8[%c0_13, %c0_14] : memref<8x128xf32, #tpu.memory_space<vmem>>, vector<8x128xf32>
    tpu.vector_store %arg8[%c0_13, %c0_14], %25 {strides = array<i32>} : memref<8x128xf32, #tpu.memory_space<vmem>>, vector<8x128xf32>,
    %c0_15 = arith.constant 0 : index
    %c0_16 = arith.constant 0 : index
    %27 = vector.load %arg7[%c0_15, %c0_16] : memref<8x128xf32, #tpu.memory_space<vmem>>, vector<8x128xf32>
    %28 = vector.shape_cast %21 : vector<16x128xf32> to vector<2x8x128xf32>
    %cst_17 = arith.constant dense<0.000000e+00> : vector<8x128xf32>
    %29 = vector.multi_reduction <add>, %28, %cst_17 [0] : vector<2x8x128xf32> to vector<8x128xf32>
    %30 = arith.addf %27, %29 : vector<8x128xf32>
    %c0_18 = arith.constant 0 : index
    %c0_19 = arith.constant 0 : index
    %31 = vector.load %arg7[%c0_18, %c0_19] : memref<8x128xf32, #tpu.memory_space<vmem>>, vector<8x128xf32>
    tpu.vector_store %arg7[%c0_18, %c0_19], %30 {strides = array<i32>} : memref<8x128xf32, #tpu.memory_space<vmem>>, vector<8x128xf32>,
    %c0_i32_20 = arith.constant 0 : i32
    %32 = arith.cmpi eq, %arg1, %c0_i32_20 : i32
    %33 = arith.extui %32 : i1 to i32
    %c0_i32_21 = arith.constant 0 : i32
    %34 = arith.cmpi ne, %33, %c0_i32_21 : i32
    scf.if %34 {
      %c0_22 = arith.constant 0 : index
      %c0_23 = arith.constant 0 : index
      %35 = vector.load %arg7[%c0_22, %c0_23] : memref<8x128xf32, #tpu.memory_space<vmem>>, vector<8x128xf32>
      %36 = vector.shape_cast %35 : vector<8x128xf32> to vector<1x8x128xf32>
      %c0_24 = arith.constant 0 : index
      %c0_25 = arith.constant 0 : index
      %c0_26 = arith.constant 0 : index
      %37 = vector.load %arg5[%c0_24, %c0_25, %c0_26] : memref<1x8x128xf32, #tpu.memory_space<vmem>>, vector<1x8x128xf32>
      tpu.vector_store %arg5[%c0_24, %c0_25, %c0_26], %36 {strides = array<i32>} : memref<1x8x128xf32, #tpu.memory_space<vmem>>, vector<1x8x128xf32>,
      %c0_27 = arith.constant 0 : index
      %c0_28 = arith.constant 0 : index
      %38 = vector.load %arg8[%c0_27, %c0_28] : memref<8x128xf32, #tpu.memory_space<vmem>>, vector<8x128xf32>
      %39 = vector.shape_cast %38 : vector<8x128xf32> to vector<1x8x128xf32>
      %c0_29 = arith.constant 0 : index
      %c0_30 = arith.constant 0 : index
      %c0_31 = arith.constant 0 : index
      %40 = vector.load %arg6[%c0_29, %c0_30, %c0_31] : memref<1x8x128xf32, #tpu.memory_space<vmem>>, vector<1x8x128xf32>
      tpu.vector_store %arg6[%c0_29, %c0_30, %c0_31], %39 {strides = array<i32>} : memref<1x8x128xf32, #tpu.memory_space<vmem>>, vector<1x8x128xf32>,
    } else {
    }
    return
  }
  func.func @transform_0(%arg0: i32, %arg1: i32) -> (i32, i32) {
    %c1_i32 = arith.constant 1 : i32
    %0 = arith.muli %arg0, %c1_i32 : i32
    %1 = arith.addi %0, %arg1 : i32
    %c0_i32 = arith.constant 0 : i32
    %2 = arith.minsi %1, %c0_i32 : i32
    %c0_i32_0 = arith.constant 0 : i32
    %c0_i32_1 = arith.constant 0 : i32
    return %2, %c0_i32_0 : i32, i32
  }
  func.func @transform_1(%arg0: i32, %arg1: i32) -> (i32, i32) {
    %c1_i32 = arith.constant 1 : i32
    %0 = arith.muli %arg0, %c1_i32 : i32
    %1 = arith.addi %0, %arg1 : i32
    %c0_i32 = arith.constant 0 : i32
    %2 = arith.minsi %1, %c0_i32 : i32
    %c0_i32_0 = arith.constant 0 : i32
    %c0_i32_1 = arith.constant 0 : i32
    return %2, %c0_i32_0 : i32, i32
  }
  func.func @transform_2(%arg0: i32, %arg1: i32) -> (i32, i32) {
    %c1_i32 = arith.constant 1 : i32
    %0 = arith.muli %arg0, %c1_i32 : i32
    %1 = arith.addi %0, %arg1 : i32
    %c0_i32 = arith.constant 0 : i32
    %2 = arith.minsi %1, %c0_i32 : i32
    %c0_i32_0 = arith.constant 0 : i32
    %c0_i32_1 = arith.constant 0 : i32
    return %2, %c0_i32_0 : i32, i32
  }
  func.func @transform_3(%arg0: i32, %arg1: i32) -> (i32, i32, i32) {
    %c0_i32 = arith.constant 0 : i32
    %c0_i32_0 = arith.constant 0 : i32
    %c0_i32_1 = arith.constant 0 : i32
    return %arg0, %c0_i32, %c0_i32_0 : i32, i32, i32
  }
  func.func @transform_4(%arg0: i32, %arg1: i32) -> (i32, i32, i32) {
    %c0_i32 = arith.constant 0 : i32
    %c0_i32_0 = arith.constant 0 : i32
    %c0_i32_1 = arith.constant 0 : i32
    return %arg0, %c0_i32, %c0_i32_0 : i32, i32, i32
  }
}

</mosaic_0001>

<llo_original>
// kernel: tpu_custom_call.1
$region0: #{tpu_custom_call.1}
  #allocation0 [shape = 'u32[]', space=smem, size = 0x4, offset = 0x4, fixed_abs, tag = 'smem constant byte address 0x4 - core index']
  #allocation1 [shape = 'u32[72,128]{1,0:T(1,128)}', space=vmem, size = 0x9000, scoped, tag = 'internal scratch']
  #allocation2 [shape = 'f32[8,128]{1,0:T(8,128)}', space=vmem, size = 0x1000, scoped, tag = 'scratch operand']
  #allocation3 [shape = 'f32[8,128]{1,0:T(8,128)}', space=vmem, size = 0x1000, scoped, tag = 'scratch operand']
  %s0 = inlined_call_operand.hbm [shape: f32[16,128], index: 0, kind: input, shape index: {}]
  %s1 = inlined_call_operand.hbm [shape: f32[16,128], index: 1, kind: input, shape index: {}]
  %s2 = inlined_call_operand.hbm [shape: f32[16,128], index: 2, kind: input, shape index: {}]
  %s3 = inlined_call_operand.hbm [shape: f32[1,8,128], index: 3, kind: output, shape index: {0}]
  %s4 = inlined_call_operand.hbm [shape: f32[1,8,128], index: 4, kind: output, shape index: {1}]
  %5 = xla_tuple %s3, %s4
  %s6 = sld [smem:[#allocation0]]
  $region50: #{tpu_custom_call.1} parent=0
    _
  %s8 = ssub.s32 1, %s6
  %s9 = scalar_select 0, %s8, %s6
  $region1: #{tpu_custom_call.1} parent=0
    #allocation4 [shape = 'u8[8192]{0}', space=vmem, size = 0x2000, scoped, tag = 'input window, operand 0, single buffered']
    #allocation5 [shape = 's32[1]{0}', space=sflag, size = 0x4, scoped, tag = 'scoped memory for tpu_custom_call.1']
    #allocation6 [shape = 's32[1]{0}', space=sflag, size = 0x4, scoped, tag = 'scoped memory for tpu_custom_call.1']
    #allocation7 [shape = 'u8[8192]{0}', space=vmem, size = 0x2000, scoped, tag = 'input window, operand 1, single buffered']
    #allocation8 [shape = 's32[1]{0}', space=sflag, size = 0x4, scoped, tag = 'scoped memory for tpu_custom_call.1']
    #allocation9 [shape = 'u8[8192]{0}', space=vmem, size = 0x2000, scoped, tag = 'input window, operand 2, single buffered']
    #allocation10 [shape = 'u8[4096]{0}', space=vmem, size = 0x1000, scoped, tag = 'output window, operand 0, single buffered']
    #allocation11 [shape = 'u8[4096]{0}', space=vmem, size = 0x1000, scoped, tag = 'output window, operand 1, single buffered']
    #allocation12 [shape = 's32[1]{0}', space=sflag, size = 0x4, scoped, tag = 'scoped memory for tpu_custom_call.1']
    %10 = vsyncpa [#allocation5], 0
    %11 = vsyncpa [#allocation8], 0
    %12 = vsyncpa [#allocation6], 0
    %13 = vsyncpa [#allocation12], 0
    // Predicated region
    $region2: #{tpu_custom_call.1} parent=1 // pred_check
      _
    $region3: #{tpu_custom_call.1} parent=1 // pred_check_branch
      %15 = sbr.rel (0) target = $region5
    $region4: #{tpu_custom_call.1} parent=1 // pred_region
      %s16 = sadd.s32 0, 0
      %p17 = scmp.lt.s32.totalorder %s16, 0
      %s18 = scalar_select %p17, %s16, 0
      %s19 = smul.u32 2, %s18
      %21 = vsyncadd [#allocation5], 0
      %s22 = smul.addr %s19, 8
      %s23 = scalar_lea.hbm %s0, %s22
      %s24 = sshll.u32 %s23, 4
      %s25 = int_to_ptr.hbm [resolvable:$true] %s24
      %s26 = sshll.u32 [#allocation4], 4
      %s27 = int_to_ptr.vmem [resolvable:$true] %s26
      %32 = dma.hbm_to_vmem [thread:$0]  %s25, 256, %s27, [#allocation5], 128, 128, 8
    $region5: #{tpu_custom_call.1} parent=1 // pred_fallthru
      _
    // Predicated region
    $region6: #{tpu_custom_call.1} parent=1 // pred_check
      _
    $region7: #{tpu_custom_call.1} parent=1 // pred_check_branch
      %34 = sbr.rel (0) target = $region9
    $region8: #{tpu_custom_call.1} parent=1 // pred_region
      %s35 = sadd.s32 0, 0
      %p36 = scmp.lt.s32.totalorder %s35, 0
      %s37 = scalar_select %p36, %s35, 0
      %s38 = smul.u32 2, %s37
      %40 = vsyncadd [#allocation8], 0
      %s41 = smul.addr %s38, 8
      %s42 = scalar_lea.hbm %s1, %s41
      %s43 = sshll.u32 %s42, 4
      %s44 = int_to_ptr.hbm [resolvable:$true] %s43
      %s45 = sshll.u32 [#allocation7], 4
      %s46 = int_to_ptr.vmem [resolvable:$true] %s45
      %51 = dma.hbm_to_vmem [thread:$0]  %s44, 256, %s46, [#allocation8], 128, 128, 8
    $region9: #{tpu_custom_call.1} parent=1 // pred_fallthru
      _
    // Predicated region
    $region10: #{tpu_custom_call.1} parent=1 // pred_check
      _
    $region11: #{tpu_custom_call.1} parent=1 // pred_check_branch
      %53 = sbr.rel (0) target = $region13
    $region12: #{tpu_custom_call.1} parent=1 // pred_region
      %s54 = sadd.s32 0, 0
      %p55 = scmp.lt.s32.totalorder %s54, 0
      %s56 = scalar_select %p55, %s54, 0
      %s57 = smul.u32 2, %s56
      %59 = vsyncadd [#allocation8], 0
      %s60 = smul.addr %s57, 8
      %s61 = scalar_lea.hbm %s2, %s60
      %s62 = sshll.u32 %s61, 4
      %s63 = int_to_ptr.hbm [resolvable:$true] %s62
      %s64 = sshll.u32 [#allocation9], 4
      %s65 = int_to_ptr.vmem [resolvable:$true] %s64
      %70 = dma.hbm_to_vmem [thread:$0]  %s63, 256, %s65, [#allocation8], 128, 128, 8
    $region13: #{tpu_custom_call.1} parent=1 // pred_fallthru
      _
    // Predicated region
    $region14: #{tpu_custom_call.1} parent=1 // pred_check
      _
    $region15: #{tpu_custom_call.1} parent=1 // pred_check_branch
      %72 = sbr.rel (0) target = $region17
    $region16: #{tpu_custom_call.1} parent=1 // pred_region
      %74 = dma.done [#allocation5], 256
    $region17: #{tpu_custom_call.1} parent=1 // pred_fallthru
      _
    // Predicated region
    $region18: #{tpu_custom_call.1} parent=1 // pred_check
      _
    $region19: #{tpu_custom_call.1} parent=1 // pred_check_branch
      %76 = sbr.rel (0) target = $region21
    $region20: #{tpu_custom_call.1} parent=1 // pred_region
      %78 = dma.done [#allocation8], 256
    $region21: #{tpu_custom_call.1} parent=1 // pred_fallthru
      _
    // Predicated region
    $region22: #{tpu_custom_call.1} parent=1 // pred_check
      _
    $region23: #{tpu_custom_call.1} parent=1 // pred_check_branch
      %80 = sbr.rel (0) target = $region25
    $region24: #{tpu_custom_call.1} parent=1 // pred_region
      %82 = dma.done [#allocation8], 256
    $region25: #{tpu_custom_call.1} parent=1 // pred_fallthru
      _
    %s83 = sadd.s32 0, 0
    %p84 = scmp.lt.s32.totalorder %s83, 0
    %s85 = scalar_select %p84, %s83, 0
    %s86 = smul.u32 2, %s85
    %s87 = sadd.s32 0, 0
    %p88 = scmp.lt.s32.totalorder %s87, 0
    %s89 = scalar_select %p88, %s87, 0
    %s90 = smul.u32 2, %s89
    %s91 = sadd.s32 0, 0
    %p92 = scmp.lt.s32.totalorder %s91, 0
    %s93 = scalar_select %p92, %s91, 0
    %s94 = smul.u32 2, %s93
    %p95 = scmp.eq.s32.totalorder 0, 0
    // Predicated region
    $region26: #{tpu_custom_call.1} parent=1 // pred_check
      %p96 = pneg %p95
    $region27: #{tpu_custom_call.1} parent=1 // pred_check_branch
      %98 = sbr.rel (%p96) target = $region29
    $region28: #{tpu_custom_call.1} parent=1 // pred_region
      %99 = vst [vmem:[#allocation2] sm:$0xff] 0.0
      %100 = vst [vmem:[#allocation3] sm:$0xff] 0.0
    $region29: #{tpu_custom_call.1} parent=1 // pred_fallthru
      _
    %v101 = vld [vmem:[#allocation4] sm:$0xff]
    %v102 = vld [vmem:[#allocation4 + $0x8] sm:$0xff]
    %v103 = vld [vmem:[#allocation7] sm:$0xff]
    %v104 = vld [vmem:[#allocation7 + $0x8] sm:$0xff]
    %v105 = vld [vmem:[#allocation9] sm:$0xff]
    %v106 = vld [vmem:[#allocation9 + $0x8] sm:$0xff]
    %v107 = vlog2.pop %v101
    %v108 = vmul.f32 %v107, 0.6931472
    %v109 = vlog2.pop %v102
    %v110 = vmul.f32 %v109, 0.6931472
    %v111 = vmax.f32 %v108, -100.0
    %v112 = vmax.f32 %v110, -100.0
    %v113 = vsub.f32 1.0, %v101
    %v114 = vsub.f32 1.0, %v102
    %v115 = vlog2.pop %v113
    %v116 = vmul.f32 %v115, 0.6931472
    %v117 = vlog2.pop %v114
    %v118 = vmul.f32 %v117, 0.6931472
    %v119 = vmax.f32 %v116, -100.0
    %v120 = vmax.f32 %v118, -100.0
    %v121 = vmul.f32 %v103, %v111
    %v122 = vmul.f32 %v104, %v112
    %v123 = vsub.f32 1.0, %v103
    %v124 = vsub.f32 1.0, %v104
    %v125 = vmul.f32 %v123, %v119
    %v126 = vmul.f32 %v124, %v120
    %v127 = vadd.f32 %v121, %v125
    %v128 = vadd.f32 %v122, %v126
    %v129 = vsub.f32 0.0, %v127
    %v130 = vsub.f32 0.0, %v128
    %v131 = vmul.f32 %v129, %v105
    %v132 = vmul.f32 %v130, %v106
    %v133 = vld [vmem:[#allocation3] sm:$0xff]
    %v134 = vadd.f32 %v129, %v130
    %v135 = vadd.f32 %v133, %v134
    %136 = vst [vmem:[#allocation3] sm:$0xff] %v135
    %v137 = vld [vmem:[#allocation2] sm:$0xff]
    %v138 = vadd.f32 %v131, %v132
    %v139 = vadd.f32 %v137, %v138
    %140 = vst [vmem:[#allocation2] sm:$0xff] %v139
    // Predicated region
    $region30: #{tpu_custom_call.1} parent=1 // pred_check
      %p141 = pneg %p95
    $region31: #{tpu_custom_call.1} parent=1 // pred_check_branch
      %143 = sbr.rel (%p141) target = $region33
    $region32: #{tpu_custom_call.1} parent=1 // pred_region
      %v144 = vld [vmem:[#allocation2] sm:$0xff]
      %145 = vst [vmem:[#allocation10] sm:$0xff] %v144
      %v146 = vld [vmem:[#allocation3] sm:$0xff]
      %147 = vst [vmem:[#allocation11] sm:$0xff] %v146
    $region33: #{tpu_custom_call.1} parent=1 // pred_fallthru
      _
    // Predicated region
    $region34: #{tpu_custom_call.1} parent=1 // pred_check
      _
    $region35: #{tpu_custom_call.1} parent=1 // pred_check_branch
      %149 = sbr.rel (0) target = $region37
    $region36: #{tpu_custom_call.1} parent=1 // pred_region
      %151 = vsyncadd [#allocation6], 0
      %s153 = sshll.u32 [#allocation10], 4
      %s154 = int_to_ptr.vmem [resolvable:$true] %s153
      %s155 = sshll.u32 %s3, 4
      %s156 = int_to_ptr.hbm [resolvable:$true] %s155
      %158 = dma.vmem_to_hbm [thread:$0]  %s154, 128, %s156, [#allocation6]
    $region37: #{tpu_custom_call.1} parent=1 // pred_fallthru
      _
    // Predicated region
    $region38: #{tpu_custom_call.1} parent=1 // pred_check
      _
    $region39: #{tpu_custom_call.1} parent=1 // pred_check_branch
      %160 = sbr.rel (0) target = $region41
    $region40: #{tpu_custom_call.1} parent=1 // pred_region
      %162 = vsyncadd [#allocation12], 0
      %s164 = sshll.u32 [#allocation11], 4
      %s165 = int_to_ptr.vmem [resolvable:$true] %s164
      %s166 = sshll.u32 %s4, 4
      %s167 = int_to_ptr.hbm [resolvable:$true] %s166
      %169 = dma.vmem_to_hbm [thread:$0]  %s165, 128, %s167, [#allocation12]
    $region41: #{tpu_custom_call.1} parent=1 // pred_fallthru
      _
    // Predicated region
    $region42: #{tpu_custom_call.1} parent=1 // pred_check
      _
    $region43: #{tpu_custom_call.1} parent=1 // pred_check_branch
      %171 = sbr.rel (0) target = $region45
    $region44: #{tpu_custom_call.1} parent=1 // pred_region
      %173 = dma.done [#allocation6], 128
    $region45: #{tpu_custom_call.1} parent=1 // pred_fallthru
      _
    // Predicated region
    $region46: #{tpu_custom_call.1} parent=1 // pred_check
      _
    $region47: #{tpu_custom_call.1} parent=1 // pred_check_branch
      %175 = sbr.rel (0) target = $region49
    $region48: #{tpu_custom_call.1} parent=1 // pred_region
      %177 = dma.done [#allocation12], 128
    $region49: #{tpu_custom_call.1} parent=1 // pred_fallthru
      _
    %178 = vsyncpa [#allocation5], 1
    %179 = vsyncpa [#allocation8], 1
    %180 = vsyncpa [#allocation6], 1
    %181 = vsyncpa [#allocation12], 1

</llo_original>
